<compile_context>
chip_gen: v6e
topology: v6e:2x2x1
jax: 0.10.0
libtpu: 0.0.40
codegen_flags: <defaults>
</compile_context>

<pallas_src>
import functools

import jax
import jax.numpy as jnp
from jax import lax
from jax.experimental import pallas as pl
from jax.experimental.pallas import tpu as pltpu

LANE = 128     # lane width (last dim)
SUBLANE = 8    # f32 sublane width (second-to-last dim)


def _round_up(x, m):
    return ((x + m - 1) // m) * m


def _pad_dim(n, mxu_width=256):
    # Full-width MXU tiles (256) only when the real dim is already that large;
    # never over-pad small (toy) dims beyond one lane group.
    m = mxu_width if n >= mxu_width else LANE
    return _round_up(n, m)


# ----------------------------------------------------------------------------
# Kernels
# ----------------------------------------------------------------------------
def _mlp_f32(x_ref, w1_ref, b1_ref, w2_ref, b2_ref, w3_ref, b3_ref):
    """Shared 3-layer MLP body. Weights are (K, N); all dots accumulate in f32;
    bias-add / ReLU stay in f32 (safe on v5e: no bf16 VPU path)."""
    x = x_ref[...].astype(w1_ref.dtype)           # bf16 MXU path if weights are bf16
    h = jnp.dot(x, w1_ref[...], preferred_element_type=jnp.float32)
    h = jnp.maximum(h + b1_ref[...].astype(jnp.float32), 0.0)
    h = jnp.dot(h.astype(w2_ref.dtype), w2_ref[...],
                preferred_element_type=jnp.float32)
    h = jnp.maximum(h + b2_ref[...].astype(jnp.float32), 0.0)
    out = jnp.dot(h.astype(w3_ref.dtype), w3_ref[...],
                  preferred_element_type=jnp.float32)
    return out + b3_ref[...].astype(jnp.float32)


def dqn_mlp_kernel(x_ref, w1_ref, b1_ref, w2_ref, b2_ref, w3_ref, b3_ref, o_ref):
    out = _mlp_f32(x_ref, w1_ref, b1_ref, w2_ref, b2_ref, w3_ref, b3_ref)
    o_ref[...] = out.astype(o_ref.dtype)


def dqn_mlp_greedy_kernel(x_ref, w1_ref, b1_ref, w2_ref, b2_ref, w3_ref, b3_ref,
                          act_ref, q_ref, *, actions):
    """Fused epilogue: greedy action + max-Q per row (tiny (tb,1) writeback)."""
    q = _mlp_f32(x_ref, w1_ref, b1_ref, w2_ref, b2_ref, w3_ref, b3_ref)
    a_pad = q.shape[-1]
    idx = lax.broadcasted_iota(jnp.int32, q.shape, 1)
    q = jnp.where(idx < actions, q, -jnp.inf)            # mask padded action lanes
    max_q = jnp.max(q, axis=-1, keepdims=True)
    best = jnp.min(jnp.where(q == max_q, idx, a_pad), axis=-1, keepdims=True)
    act_ref[...] = best.astype(jnp.int32)
    q_ref[...] = max_q.astype(q_ref.dtype)


# ----------------------------------------------------------------------------
# One-time parameter preparation (outside the hot path)
# ----------------------------------------------------------------------------
def prepare_params(params, dtype=None, mxu_width=256):
    """One-time glue:
      * transpose torch (out, in) weights to MXU-native (K, N),
      * zero-pad hidden/action dims to lane multiples (128, or 256 when the
        real dim is already >= 256 to fill the v6e/v7x MXU width),
      * biases reshaped to (1, out),
      * optional cast to bf16 (v6e/v7x); kernel accumulation stays f32.
    """
    w1, w2, w3 = params["w1"], params["w2"], params["w3"]
    b1, b2, b3 = params["b1"], params["b2"], params["b3"]
    hidden, in_size = w1.shape
    actions = w3.shape[0]
    h_pad = _pad_dim(hidden, mxu_width)
    a_pad = _pad_dim(actions, mxu_width)

    def padded_t(w, k, n):              # (out, in) -> (K, N), zero-padded
        wt = w.T
        return jnp.pad(wt, ((0, k - wt.shape[0]), (0, n - wt.shape[1])))

    def pad_bias(b, n):
        return jnp.pad(b.reshape(1, -1), ((0, 0), (0, n - b.shape[0])))

    pp = {
        "w1": padded_t(w1, in_size, h_pad),
        "w2": padded_t(w2, h_pad, h_pad),
        "w3": padded_t(w3, h_pad, a_pad),
        "b1": pad_bias(b1, h_pad),
        "b2": pad_bias(b2, h_pad),
        "b3": pad_bias(b3, a_pad),
    }
    if dtype is not None:
        pp = jax.tree.map(lambda a: a.astype(dtype), pp)
    pp["actions"] = int(actions)
    return pp


# ----------------------------------------------------------------------------
# Wrappers
# ----------------------------------------------------------------------------
def _batch_tile(B, block_b):
    """Large tiles to amortize per-step overhead, but >= 2 grid steps when the
    batch allows so the 'parallel' axis shards across v7x's two TensorCores."""
    b_min = _round_up(B, SUBLANE)
    tb = _round_up(min(block_b, b_min), SUBLANE)
    if pl.cdiv(B, tb) < 2 and b_min > SUBLANE:
        tb = _round_up(pl.cdiv(b_min, 2), SUBLANE)
    return tb


def _common_specs(tb, in_size, h_pad, a_pad, x_buffers):
    const = lambda i: (0, 0)
    if x_buffers is not None:
        x_spec = pl.BlockSpec((tb, in_size), lambda i: (i, 0),
                              pipeline_mode=pl.Buffered(x_buffers))
    else:
        x_spec = pl.BlockSpec((tb, in_size), lambda i: (i, 0))
    return [
        x_spec,                                   # x: tiled over batch
        pl.BlockSpec((in_size, h_pad), const),    # w1 (VMEM-resident)
        pl.BlockSpec((1, h_pad), const),          # b1
        pl.BlockSpec((h_pad, h_pad), const),      # w2
        pl.BlockSpec((1, h_pad), const),          # b2
        pl.BlockSpec((h_pad, a_pad), const),      # w3
        pl.BlockSpec((1, a_pad), const),          # b3
    ]


def _cost(pp, B, in_size, h_pad, a_pad, x_dtype, out_elems, out_dtype):
    flops = 2 * B * (in_size * h_pad + h_pad * h_pad + h_pad * a_pad)
    w_bytes = sum(int(jnp.dtype(pp[k].dtype).itemsize) * int(pp[k].size)
                  for k in ("w1", "w2", "w3", "b1", "b2", "b3"))
    bytes_accessed = (int(jnp.dtype(x_dtype).itemsize) * B * in_size
                      + int(jnp.dtype(out_dtype).itemsize) * out_elems
                      + w_bytes)
    return pl.CostEstimate(flops=int(flops), transcendentals=0,
                           bytes_accessed=int(bytes_accessed))


def dqn_forward(x, pp, *, block_b=2048, out_dtype=None, x_buffers=None):
    """x: (B, input_size); pp: output of prepare_params. Returns (B, actions)."""
    actions = pp["actions"]
    B, in_size = x.shape
    h_pad = pp["w1"].shape[1]
    a_pad = pp["w3"].shape[1]
    out_dtype = out_dtype or x.dtype

    tb = _batch_tile(B, block_b)
    nb = pl.cdiv(B, tb)   # ragged last tile: junk rows are independent & dropped

    out = pl.pallas_call(
        dqn_mlp_kernel,
        out_shape=jax.ShapeDtypeStruct((B, a_pad), out_dtype),
        grid=(nb,),
        in_specs=_common_specs(tb, in_size, h_pad, a_pad, x_buffers),
        out_specs=pl.BlockSpec((tb, a_pad), lambda i: (i, 0)),
        compiler_params=pltpu.CompilerParams(
            dimension_semantics=("parallel",)),
        cost_estimate=_cost(pp, B, in_size, h_pad, a_pad, x.dtype,
                            B * a_pad, out_dtype),
    )(x, pp["w1"], pp["b1"], pp["w2"], pp["b2"], pp["w3"], pp["b3"])

    # Padded action lanes are exact zeros of the padded linear layer.
    # TODO(synk): in a real RL loop keep the (B, a_pad) slab (or use dqn_greedy)
    # to avoid this per-call slice copy.
    return out[:, :actions]


def dqn_greedy(x, pp, *, block_b=2048, x_buffers=None):
    """Fused argmax/max-Q epilogue. Returns (actions int32 (B,), max-Q f32 (B,))."""
    actions = pp["actions"]
    B, in_size = x.shape
    h_pad = pp["w1"].shape[1]
    a_pad = pp["w3"].shape[1]

    tb = _batch_tile(B, block_b)
    nb = pl.cdiv(B, tb)

    kernel = functools.partial(dqn_mlp_greedy_kernel, actions=actions)
    act, max_q = pl.pallas_call(
        kernel,
        out_shape=(jax.ShapeDtypeStruct((B, 1), jnp.int32),
                   jax.ShapeDtypeStruct((B, 1), jnp.float32)),
        grid=(nb,),
        in_specs=_common_specs(tb, in_size, h_pad, a_pad, x_buffers),
        out_specs=(pl.BlockSpec((tb, 1), lambda i: (i, 0)),
                   pl.BlockSpec((tb, 1), lambda i: (i, 0))),
        compiler_params=pltpu.CompilerParams(
            dimension_semantics=("parallel",)),
        cost_estimate=_cost(pp, B, in_size, h_pad, a_pad, x.dtype,
                            2 * B, jnp.float32),
    )(x, pp["w1"], pp["b1"], pp["w2"], pp["b2"], pp["w3"], pp["b3"])
    return act[:, 0], max_q[:, 0]


# ----------------------------------------------------------------------------
# Init + reference
# ----------------------------------------------------------------------------
def init_params(key, input_size, hidden_size, actions, dtype=jnp.float32):
    """Mimics torch.nn.Linear default init (uniform +-1/sqrt(fan_in))."""
    ks = jax.random.split(key, 6)

    def lin(kw, kb, fan_in, fan_out):
        bound = 1.0 / jnp.sqrt(fan_in)
        w = jax.random.uniform(kw, (fan_out, fan_in), dtype, -bound, bound)
        b = jax.random.uniform(kb, (fan_out,), dtype, -bound, bound)
        return w, b

    w1, b1 = lin(ks[0], ks[1], input_size, hidden_size)
    w2, b2 = lin(ks[2], ks[3], hidden_size, hidden_size)
    w3, b3 = lin(ks[4], ks[5], hidden_size, actions)
    return {"w1": w1, "b1": b1, "w2": w2, "b2": b2, "w3": w3, "b3": b3}


def _reference(x, params):
    hp = lax.Precision.HIGHEST
    h = jnp.maximum(jnp.dot(x, params["w1"].T, precision=hp) + params["b1"], 0.0)
    h = jnp.maximum(jnp.dot(h, params["w2"].T, precision=hp) + params["b2"], 0.0)
    return jnp.dot(h, params["w3"].T, precision=hp) + params["b3"]


if __name__ == "__main__":
    key = jax.random.PRNGKey(0)
    k_x, k_x2, k_p = jax.random.split(key, 3)

    batch, input_size, hidden_size, actions = 2, 16, 32, 8
    params = init_params(k_p, input_size, hidden_size, actions)
    pp = prepare_params(params)                   # one-time transpose/pad

    # Small spec-sized check (single ragged tile, no per-call jnp.pad of x).
    x = jax.random.normal(k_x, (batch, input_size), jnp.float32)
    out = jax.block_until_ready(dqn_forward(x, pp))
    ref = _reference(x, params)
    assert out.shape == (batch, actions)
    assert jnp.allclose(out, ref, atol=1e-3, rtol=1e-3)

    # Larger batch: >= 2 grid steps (dual-TC on v7x) with a ragged last tile.
    x2 = jax.random.normal(k_x2, (300, input_size), jnp.float32)
    out2 = jax.block_until_ready(dqn_forward(x2, pp))
    ref2 = _reference(x2, params)
    assert out2.shape == (300, actions)
    assert jnp.allclose(out2, ref2, atol=1e-3, rtol=1e-3)

    # bf16 weights/activations (v6e/v7x MXU-native), f32 accumulate: looser tol.
    pp_bf16 = prepare_params(params, dtype=jnp.bfloat16)
    out_bf = jax.block_until_ready(dqn_forward(x2, pp_bf16, out_dtype=jnp.float32))
    assert jnp.allclose(out_bf, ref2, atol=1e-1, rtol=5e-2)

    # Fused greedy epilogue: must agree with the full-Q kernel exactly.
    act, maxq = dqn_greedy(x2, pp)
    jax.block_until_ready((act, maxq))
    assert jnp.array_equal(act, jnp.argmax(out2, axis=-1).astype(jnp.int32))
    assert jnp.allclose(maxq, jnp.max(out2, axis=-1), atol=1e-6, rtol=1e-6)

    print("KERNEL_OK")
</pallas_src>

<mosaic_0001>
module attributes {stable_mosaic.version = 11 : i64} {
  func.func @dqn_mlp_kernel(%arg0: i32, %arg1: memref<8x16xf32, #tpu.memory_space<vmem>>, %arg2: memref<16x128xf32, #tpu.memory_space<vmem>>, %arg3: memref<1x128xf32, #tpu.memory_space<vmem>>, %arg4: memref<128x128xf32, #tpu.memory_space<vmem>>, %arg5: memref<1x128xf32, #tpu.memory_space<vmem>>, %arg6: memref<128x128xf32, #tpu.memory_space<vmem>>, %arg7: memref<1x128xf32, #tpu.memory_space<vmem>>, %arg8: memref<8x128xf32, #tpu.memory_space<vmem>>) attributes {dimension_semantics = [#tpu.dimension_semantics<parallel>], iteration_bounds = array<i64: 1>, scalar_prefetch = 0 : i64, scratch_operands = 0 : i64, tpu.core_type = #tpu.core_type<tc>, window_params = [{transform_indices = @transform_0, window_bounds = array<i64: 8, 16>}, {pipeline_mode = #tpu.pipeline_mode<synchronous>, transform_indices = @transform_1, window_bounds = array<i64: 16, 128>}, {pipeline_mode = #tpu.pipeline_mode<synchronous>, transform_indices = @transform_2, window_bounds = array<i64: 1, 128>}, {pipeline_mode = #tpu.pipeline_mode<synchronous>, transform_indices = @transform_3, window_bounds = array<i64: 128, 128>}, {pipeline_mode = #tpu.pipeline_mode<synchronous>, transform_indices = @transform_4, window_bounds = array<i64: 1, 128>}, {pipeline_mode = #tpu.pipeline_mode<synchronous>, transform_indices = @transform_5, window_bounds = array<i64: 128, 128>}, {pipeline_mode = #tpu.pipeline_mode<synchronous>, transform_indices = @transform_6, window_bounds = array<i64: 1, 128>}, {transform_indices = @transform_7, window_bounds = array<i64: 8, 128>}]} {
    %c0 = arith.constant 0 : index
    %c0_0 = arith.constant 0 : index
    %0 = vector.load %arg1[%c0, %c0_0] : memref<8x16xf32, #tpu.memory_space<vmem>>, vector<8x16xf32>
    %c0_1 = arith.constant 0 : index
    %c0_2 = arith.constant 0 : index
    %1 = vector.load %arg2[%c0_1, %c0_2] : memref<16x128xf32, #tpu.memory_space<vmem>>, vector<16x128xf32>
    %cst = arith.constant dense<0.000000e+00> : vector<8x128xf32>
    %2 = tpu.matmul %0, %1, %cst {dimension_numbers = #tpu.dot_dimension_numbers<[1], [0], [0], [1], [0, 0, 1, 1], [], []>} : vector<8x16xf32>, vector<16x128xf32>, vector<8x128xf32> -> vector<8x128xf32>
    %c0_3 = arith.constant 0 : index
    %c0_4 = arith.constant 0 : index
    %3 = vector.load %arg3[%c0_3, %c0_4] : memref<1x128xf32, #tpu.memory_space<vmem>>, vector<1x128xf32>
    %4 = vector.broadcast %3 : vector<1x128xf32> to vector<8x128xf32>
    %5 = arith.addf %2, %4 : vector<8x128xf32>
    %cst_5 = arith.constant 0.000000e+00 : f32
    %6 = vector.broadcast %cst_5 : f32 to vector<8x128xf32>
    %7 = arith.maximumf %5, %6 : vector<8x128xf32>
    %c0_6 = arith.constant 0 : index
    %c0_7 = arith.constant 0 : index
    %8 = vector.load %arg4[%c0_6, %c0_7] : memref<128x128xf32, #tpu.memory_space<vmem>>, vector<128x128xf32>
    %cst_8 = arith.constant dense<0.000000e+00> : vector<8x128xf32>
    %9 = tpu.matmul %7, %8, %cst_8 {dimension_numbers = #tpu.dot_dimension_numbers<[1], [0], [0], [1], [0, 0, 1, 1], [], []>} : vector<8x128xf32>, vector<128x128xf32>, vector<8x128xf32> -> vector<8x128xf32>
    %c0_9 = arith.constant 0 : index
    %c0_10 = arith.constant 0 : index
    %10 = vector.load %arg5[%c0_9, %c0_10] : memref<1x128xf32, #tpu.memory_space<vmem>>, vector<1x128xf32>
    %11 = vector.broadcast %10 : vector<1x128xf32> to vector<8x128xf32>
    %12 = arith.addf %9, %11 : vector<8x128xf32>
    %cst_11 = arith.constant 0.000000e+00 : f32
    %13 = vector.broadcast %cst_11 : f32 to vector<8x128xf32>
    %14 = arith.maximumf %12, %13 : vector<8x128xf32>
    %c0_12 = arith.constant 0 : index
    %c0_13 = arith.constant 0 : index
    %15 = vector.load %arg6[%c0_12, %c0_13] : memref<128x128xf32, #tpu.memory_space<vmem>>, vector<128x128xf32>
    %cst_14 = arith.constant dense<0.000000e+00> : vector<8x128xf32>
    %16 = tpu.matmul %14, %15, %cst_14 {dimension_numbers = #tpu.dot_dimension_numbers<[1], [0], [0], [1], [0, 0, 1, 1], [], []>} : vector<8x128xf32>, vector<128x128xf32>, vector<8x128xf32> -> vector<8x128xf32>
    %c0_15 = arith.constant 0 : index
    %c0_16 = arith.constant 0 : index
    %17 = vector.load %arg7[%c0_15, %c0_16] : memref<1x128xf32, #tpu.memory_space<vmem>>, vector<1x128xf32>
    %18 = vector.broadcast %17 : vector<1x128xf32> to vector<8x128xf32>
    %19 = arith.addf %16, %18 : vector<8x128xf32>
    %c0_17 = arith.constant 0 : index
    %c0_18 = arith.constant 0 : index
    %20 = vector.load %arg8[%c0_17, %c0_18] : memref<8x128xf32, #tpu.memory_space<vmem>>, vector<8x128xf32>
    tpu.vector_store %arg8[%c0_17, %c0_18], %19 {strides = array<i32>} : memref<8x128xf32, #tpu.memory_space<vmem>>, vector<8x128xf32>,
    return
  }
  func.func @transform_0(%arg0: i32) -> (i32, i32) {
    %c0_i32 = arith.constant 0 : i32
    %c0_i32_0 = arith.constant 0 : i32
    return %arg0, %c0_i32 : i32, i32
  }
  func.func @transform_1(%arg0: i32) -> (i32, i32) {
    %c0_i32 = arith.constant 0 : i32
    %c0_i32_0 = arith.constant 0 : i32
    %c0_i32_1 = arith.constant 0 : i32
    return %c0_i32, %c0_i32_0 : i32, i32
  }
  func.func @transform_2(%arg0: i32) -> (i32, i32) {
    %c0_i32 = arith.constant 0 : i32
    %c0_i32_0 = arith.constant 0 : i32
    %c0_i32_1 = arith.constant 0 : i32
    return %c0_i32, %c0_i32_0 : i32, i32
  }
  func.func @transform_3(%arg0: i32) -> (i32, i32) {
    %c0_i32 = arith.constant 0 : i32
    %c0_i32_0 = arith.constant 0 : i32
    %c0_i32_1 = arith.constant 0 : i32
    return %c0_i32, %c0_i32_0 : i32, i32
  }
  func.func @transform_4(%arg0: i32) -> (i32, i32) {
    %c0_i32 = arith.constant 0 : i32
    %c0_i32_0 = arith.constant 0 : i32
    %c0_i32_1 = arith.constant 0 : i32
    return %c0_i32, %c0_i32_0 : i32, i32
  }
  func.func @transform_5(%arg0: i32) -> (i32, i32) {
    %c0_i32 = arith.constant 0 : i32
    %c0_i32_0 = arith.constant 0 : i32
    %c0_i32_1 = arith.constant 0 : i32
    return %c0_i32, %c0_i32_0 : i32, i32
  }
  func.func @transform_6(%arg0: i32) -> (i32, i32) {
    %c0_i32 = arith.constant 0 : i32
    %c0_i32_0 = arith.constant 0 : i32
    %c0_i32_1 = arith.constant 0 : i32
    return %c0_i32, %c0_i32_0 : i32, i32
  }
  func.func @transform_7(%arg0: i32) -> (i32, i32) {
    %c0_i32 = arith.constant 0 : i32
    %c0_i32_0 = arith.constant 0 : i32
    return %arg0, %c0_i32 : i32, i32
  }
}

</mosaic_0001>

<llo_original>
// kernel: tpu_custom_call.1
$region0: #{tpu_custom_call.1}
  #allocation0 [shape = 'u32[]', space=smem, size = 0x4, offset = 0x4, fixed_abs, tag = 'smem constant byte address 0x4 - core index']
  #allocation1 [shape = 'u32[144,128]{1,0:T(1,128)}', space=vmem, size = 0x12000, scoped, tag = 'internal scratch']
  %s0 = inlined_call_operand.hbm [shape: f32[2,16], index: 0, kind: input, shape index: {}]
  %s1 = inlined_call_operand.hbm [shape: f32[16,128], index: 1, kind: input, shape index: {}]
  %s2 = inlined_call_operand.vmem [shape: f32[1,128], index: 2, kind: input, shape index: {}]
  %s3 = inlined_call_operand.hbm [shape: f32[128,128], index: 3, kind: input, shape index: {}]
  %s4 = inlined_call_operand.vmem [shape: f32[1,128], index: 4, kind: input, shape index: {}]
  %s5 = inlined_call_operand.hbm [shape: f32[128,128], index: 5, kind: input, shape index: {}]
  %s6 = inlined_call_operand.vmem [shape: f32[1,128], index: 6, kind: input, shape index: {}]
  %s7 = inlined_call_operand.hbm [shape: f32[2,128], index: 7, kind: output, shape index: {}]
  %s8 = sld [smem:[#allocation0]]
  $region54: #{tpu_custom_call.1} parent=0
    _
  %s10 = ssub.s32 1, %s8
  %s11 = scalar_select 0, %s10, %s8
  $region1: #{tpu_custom_call.1} parent=0
    #allocation2 [shape = 'u8[4096]{0}', space=vmem, size = 0x1000, scoped, tag = 'input window, operand 0, single buffered']
    #allocation3 [shape = 's32[1]{0}', space=sflag, size = 0x4, scoped, tag = 'scoped memory for tpu_custom_call.1']
    #allocation4 [shape = 's32[1]{0}', space=sflag, size = 0x4, scoped, tag = 'scoped memory for tpu_custom_call.1']
    #allocation5 [shape = 'u8[8192]{0}', space=vmem, size = 0x2000, scoped, tag = 'input window, operand 1, single buffered']
    #allocation6 [shape = 's32[1]{0}', space=sflag, size = 0x4, scoped, tag = 'scoped memory for tpu_custom_call.1']
    #allocation7 [shape = 'u8[65536]{0}', space=vmem, size = 0x10000, scoped, tag = 'input window, operand 3, single buffered']
    #allocation8 [shape = 'u8[65536]{0}', space=vmem, size = 0x10000, scoped, tag = 'input window, operand 5, single buffered']
    #allocation9 [shape = 's32[1]{0}', space=sflag, size = 0x4, scoped, tag = 'scoped memory for tpu_custom_call.1']
    #allocation10 [shape = 'u8[4096]{0}', space=vmem, size = 0x1000, scoped, tag = 'output window, operand 0, single buffered']
    %12 = vsyncpa [#allocation3], 0
    %13 = vsyncpa [#allocation6], 0
    %14 = vsyncpa [#allocation9], 0
    %15 = vsyncpa [#allocation4], 0
    // Predicated region
    $region2: #{tpu_custom_call.1} parent=1 // pred_check
      _
    $region3: #{tpu_custom_call.1} parent=1 // pred_check_branch
      %17 = sbr.rel (0) target = $region5
    $region4: #{tpu_custom_call.1} parent=1 // pred_region
      %s19 = ssub.s32 128, 32
      %20 = vsyncadd [#allocation3], %s19
      %s21 = sshll.u32 [#allocation2], 4
      %s22 = int_to_ptr.vmem [resolvable:$true] %s21
      %27 = dma.hbm_to_vmem [thread:$0]  %s0, 32, %s22, [#allocation3], 32, 32, 2
    $region5: #{tpu_custom_call.1} parent=1 // pred_fallthru
      _
    // Predicated region
    $region6: #{tpu_custom_call.1} parent=1 // pred_check
      _
    $region7: #{tpu_custom_call.1} parent=1 // pred_check_branch
      %29 = sbr.rel (0) target = $region9
    $region8: #{tpu_custom_call.1} parent=1 // pred_region
      %s31 = ssub.s32 256, 256
      %32 = vsyncadd [#allocation6], %s31
      %s33 = sshll.u32 [#allocation5], 4
      %s34 = int_to_ptr.vmem [resolvable:$true] %s33
      %39 = dma.hbm_to_vmem [thread:$0]  %s1, 256, %s34, [#allocation6], 128, 128, 8
    $region9: #{tpu_custom_call.1} parent=1 // pred_fallthru
      _
    // Predicated region
    $region10: #{tpu_custom_call.1} parent=1 // pred_check
      _
    $region11: #{tpu_custom_call.1} parent=1 // pred_check_branch
      %41 = sbr.rel (0) target = $region13
    $region12: #{tpu_custom_call.1} parent=1 // pred_region
      _
    $region13: #{tpu_custom_call.1} parent=1 // pred_fallthru
      _
    // Predicated region
    $region14: #{tpu_custom_call.1} parent=1 // pred_check
      _
    $region15: #{tpu_custom_call.1} parent=1 // pred_check_branch
      %43 = sbr.rel (0) target = $region17
    $region16: #{tpu_custom_call.1} parent=1 // pred_region
      %s45 = ssub.s32 2048, 2048
      %46 = vsyncadd [#allocation6], %s45
      %s47 = sshll.u32 [#allocation7], 4
      %s48 = int_to_ptr.vmem [resolvable:$true] %s47
      %53 = dma.hbm_to_vmem [thread:$0]  %s3, 2048, %s48, [#allocation6], 128, 128, 8
    $region17: #{tpu_custom_call.1} parent=1 // pred_fallthru
      _
    // Predicated region
    $region18: #{tpu_custom_call.1} parent=1 // pred_check
      _
    $region19: #{tpu_custom_call.1} parent=1 // pred_check_branch
      %55 = sbr.rel (0) target = $region21
    $region20: #{tpu_custom_call.1} parent=1 // pred_region
      _
    $region21: #{tpu_custom_call.1} parent=1 // pred_fallthru
      _
    // Predicated region
    $region22: #{tpu_custom_call.1} parent=1 // pred_check
      _
    $region23: #{tpu_custom_call.1} parent=1 // pred_check_branch
      %57 = sbr.rel (0) target = $region25
    $region24: #{tpu_custom_call.1} parent=1 // pred_region
      %s59 = ssub.s32 2048, 2048
      %60 = vsyncadd [#allocation9], %s59
      %s61 = sshll.u32 [#allocation8], 4
      %s62 = int_to_ptr.vmem [resolvable:$true] %s61
      %67 = dma.hbm_to_vmem [thread:$0]  %s5, 2048, %s62, [#allocation9], 128, 128, 8
    $region25: #{tpu_custom_call.1} parent=1 // pred_fallthru
      _
    // Predicated region
    $region26: #{tpu_custom_call.1} parent=1 // pred_check
      _
    $region27: #{tpu_custom_call.1} parent=1 // pred_check_branch
      %69 = sbr.rel (0) target = $region29
    $region28: #{tpu_custom_call.1} parent=1 // pred_region
      _
    $region29: #{tpu_custom_call.1} parent=1 // pred_fallthru
      _
    // Predicated region
    $region30: #{tpu_custom_call.1} parent=1 // pred_check
      _
    $region31: #{tpu_custom_call.1} parent=1 // pred_check_branch
      %71 = sbr.rel (0) target = $region33
    $region32: #{tpu_custom_call.1} parent=1 // pred_region
      %72 = dma.done [#allocation3], 128
    $region33: #{tpu_custom_call.1} parent=1 // pred_fallthru
      _
    // Predicated region
    $region34: #{tpu_custom_call.1} parent=1 // pred_check
      _
    $region35: #{tpu_custom_call.1} parent=1 // pred_check_branch
      %74 = sbr.rel (0) target = $region37
    $region36: #{tpu_custom_call.1} parent=1 // pred_region
      %75 = dma.done [#allocation6], 256
    $region37: #{tpu_custom_call.1} parent=1 // pred_fallthru
      _
    // Predicated region
    $region38: #{tpu_custom_call.1} parent=1 // pred_check
      _
    $region39: #{tpu_custom_call.1} parent=1 // pred_check_branch
      %77 = sbr.rel (0) target = $region41
    $region40: #{tpu_custom_call.1} parent=1 // pred_region
      %78 = dma.done [#allocation6], 2048
    $region41: #{tpu_custom_call.1} parent=1 // pred_fallthru
      _
    // Predicated region
    $region42: #{tpu_custom_call.1} parent=1 // pred_check
      _
    $region43: #{tpu_custom_call.1} parent=1 // pred_check_branch
      %80 = sbr.rel (0) target = $region45
    $region44: #{tpu_custom_call.1} parent=1 // pred_region
      %81 = dma.done [#allocation9], 2048
    $region45: #{tpu_custom_call.1} parent=1 // pred_fallthru
      _
    %v82 = vld [vmem:[#allocation2] sm:$0xff]
    %v83 = vld [vmem:[#allocation5] sm:$0xff]
    %v84 = vld [vmem:[#allocation5 + $0x8] sm:$0xff]
    %v85 = vld [vmem:[%s2] sm:$0x1]
    %v87 = vlaneseq
    %v88 = vshrl.u32 %v87, 7
    %v89 = vsub.s32 0, %v88
    %v90 = vrot.slane %v85, %v89
    %vm92 = vcmask 130048
    %v94 = vsel %vm92, %v82, 0
    %96 = vmatprep.subr.mxu0 0.0
    %97 = vmatpush1.msra.mxu0 0.0
    %98 = vmatprep.subr.mxu0 0.0
    %99 = vmatpush1.msra.mxu0 0.0
    %100 = vmatprep.subr.mxu0 0.0
    %101 = vmatpush1.msra.mxu0 0.0
    %102 = vmatprep.subr.mxu0 0.0
    %103 = vmatpush1.msra.mxu0 0.0
    %104 = vmatprep.subr.mxu0 0.0
    %105 = vmatpush1.msra.mxu0 0.0
    %106 = vmatprep.subr.mxu0 0.0
    %107 = vmatpush1.msra.mxu0 0.0
    %108 = vmatprep.subr.mxu0 0.0
    %109 = vmatpush1.msra.mxu0 0.0
    %110 = vmatprep.subr.mxu0 0.0
    %111 = vmatpush1.msra.mxu0 0.0
    %112 = vmatprep.subr.mxu0 0.0
    %113 = vmatpush1.msra.mxu0 0.0
    %114 = vmatprep.subr.mxu0 0.0
    %115 = vmatpush1.msra.mxu0 0.0
    %116 = vmatprep.subr.mxu0 0.0
    %117 = vmatpush1.msra.mxu0 0.0
    %118 = vmatprep.subr.mxu0 0.0
    %119 = vmatpush1.msra.mxu0 0.0
    %120 = vmatprep.subr.mxu0 0.0
    %121 = vmatpush1.msra.mxu0 0.0
    %122 = vmatprep.subr.mxu0 0.0
    %123 = vmatpush1.msra.mxu0 0.0
    %124 = vmatprep.subr.mxu0 0.0
    %125 = vmatpush1.msra.mxu0 %v84
    %126 = vmatprep.subr.mxu0 0.0
    %127 = vmatpush1.msra.mxu0 %v83
    %128 = vmatprep.subr.mxu0 0.0
    %129 = vmatpush2.msra.mxu0 0.0
    %130 = vmatprep.subr.mxu0 0.0
    %131 = vmatpush2.msra.mxu0 0.0
    %132 = vmatprep.subr.mxu0 0.0
    %133 = vmatpush2.msra.mxu0 0.0
    %134 = vmatprep.subr.mxu0 0.0
    %135 = vmatpush2.msra.mxu0 0.0
    %136 = vmatprep.subr.mxu0 0.0
    %137 = vmatpush2.msra.mxu0 0.0
    %138 = vmatprep.subr.mxu0 0.0
    %139 = vmatpush2.msra.mxu0 0.0
    %140 = vmatprep.subr.mxu0 0.0
    %141 = vmatpush2.msra.mxu0 0.0
    %142 = vmatprep.subr.mxu0 0.0
    %143 = vmatpush2.msra.mxu0 0.0
    %144 = vmatprep.subr.mxu0 0.0
    %145 = vmatpush2.msra.mxu0 0.0
    %146 = vmatprep.subr.mxu0 0.0
    %147 = vmatpush2.msra.mxu0 0.0
    %148 = vmatprep.subr.mxu0 0.0
    %149 = vmatpush2.msra.mxu0 0.0
    %150 = vmatprep.subr.mxu0 0.0
    %151 = vmatpush2.msra.mxu0 0.0
    %152 = vmatprep.subr.mxu0 0.0
    %153 = vmatpush2.msra.mxu0 0.0
    %154 = vmatprep.subr.mxu0 0.0
    %155 = vmatpush2.msra.mxu0 0.0
    %156 = vmatprep.subr.mxu0 0.0
    %157 = vmatpush2.msra.mxu0 0.0
    %158 = vmatprep.subr.mxu0 0.0
    %159 = vmatpush2.msra.mxu0 0.0
    %160 = vmatprep.mubr.f32.mxu0 0.0
    %161 = vmatmul.mubr.f32.gmra.mxu0 %v94
    %v162 = vpop.f32.mrf.mxu0
    %v163 = vadd.f32 %v90, %v162
    %v164 = vpop.f32.mrf.mxu0
    %165 = vdwg.mxu0
    %v166 = vmax.f32 %v163, 0.0
    %v167 = vld [vmem:[#allocation7] sm:$0xff]
    %v168 = vld [vmem:[#allocation7 + $0x8] sm:$0xff]
    %v169 = vld [vmem:[#allocation7 + $0x10] sm:$0xff]
    %v170 = vld [vmem:[#allocation7 + $0x18] sm:$0xff]
    %v171 = vld [vmem:[#allocation7 + $0x20] sm:$0xff]
    %v172 = vld [vmem:[#allocation7 + $0x28] sm:$0xff]
    %v173 = vld [vmem:[#allocation7 + $0x30] sm:$0xff]
    %v174 = vld [vmem:[#allocation7 + $0x38] sm:$0xff]
    %v175 = vld [vmem:[#allocation7 + $0x40] sm:$0xff]
    %v176 = vld [vmem:[#allocation7 + $0x48] sm:$0xff]
    %v177 = vld [vmem:[#allocation7 + $0x50] sm:$0xff]
    %v178 = vld [vmem:[#allocation7 + $0x58] sm:$0xff]
    %v179 = vld [vmem:[#allocation7 + $0x60] sm:$0xff]
    %v180 = vld [vmem:[#allocation7 + $0x68] sm:$0xff]
    %v181 = vld [vmem:[#allocation7 + $0x70] sm:$0xff]
    %v182 = vld [vmem:[#allocation7 + $0x78] sm:$0xff]
    %v183 = vld [vmem:[%s4] sm:$0x1]
    %v185 = vlaneseq
    %v186 = vshrl.u32 %v185, 7
    %v187 = vsub.s32 0, %v186
    %v188 = vrot.slane %v183, %v187
    %190 = vmatprep.subr.mxu0 0.0
    %191 = vmatpush1.msra.mxu0 %v182
    %192 = vmatprep.subr.mxu0 0.0
    %193 = vmatpush1.msra.mxu0 %v181
    %194 = vmatprep.subr.mxu0 0.0
    %195 = vmatpush1.msra.mxu0 %v180
    %196 = vmatprep.subr.mxu0 0.0
    %197 = vmatpush1.msra.mxu0 %v179
    %198 = vmatprep.subr.mxu0 0.0
    %199 = vmatpush1.msra.mxu0 %v178
    %200 = vmatprep.subr.mxu0 0.0
    %201 = vmatpush1.msra.mxu0 %v177
    %202 = vmatprep.subr.mxu0 0.0
    %203 = vmatpush1.msra.mxu0 %v176
    %204 = vmatprep.subr.mxu0 0.0
    %205 = vmatpush1.msra.mxu0 %v175
    %206 = vmatprep.subr.mxu0 0.0
    %207 = vmatpush1.msra.mxu0 %v174
    %208 = vmatprep.subr.mxu0 0.0
    %209 = vmatpush1.msra.mxu0 %v173
    %210 = vmatprep.subr.mxu0 0.0
    %211 = vmatpush1.msra.mxu0 %v172
    %212 = vmatprep.subr.mxu0 0.0
    %213 = vmatpush1.msra.mxu0 %v171
    %214 = vmatprep.subr.mxu0 0.0
    %215 = vmatpush1.msra.mxu0 %v170
    %216 = vmatprep.subr.mxu0 0.0
    %217 = vmatpush1.msra.mxu0 %v169
    %218 = vmatprep.subr.mxu0 0.0
    %219 = vmatpush1.msra.mxu0 %v168
    %220 = vmatprep.subr.mxu0 0.0
    %221 = vmatpush1.msra.mxu0 %v167
    %222 = vmatprep.subr.mxu0 0.0
    %223 = vmatpush2.msra.mxu0 0.0
    %224 = vmatprep.subr.mxu0 0.0
    %225 = vmatpush2.msra.mxu0 0.0
    %226 = vmatprep.subr.mxu0 0.0
    %227 = vmatpush2.msra.mxu0 0.0
    %228 = vmatprep.subr.mxu0 0.0
    %229 = vmatpush2.msra.mxu0 0.0
    %230 = vmatprep.subr.mxu0 0.0
    %231 = vmatpush2.msra.mxu0 0.0
    %232 = vmatprep.subr.mxu0 0.0
    %233 = vmatpush2.msra.mxu0 0.0
    %234 = vmatprep.subr.mxu0 0.0
    %235 = vmatpush2.msra.mxu0 0.0
    %236 = vmatprep.subr.mxu0 0.0
    %237 = vmatpush2.msra.mxu0 0.0
    %238 = vmatprep.subr.mxu0 0.0
    %239 = vmatpush2.msra.mxu0 0.0
    %240 = vmatprep.subr.mxu0 0.0
    %241 = vmatpush2.msra.mxu0 0.0
    %242 = vmatprep.subr.mxu0 0.0
    %243 = vmatpush2.msra.mxu0 0.0
    %244 = vmatprep.subr.mxu0 0.0
    %245 = vmatpush2.msra.mxu0 0.0
    %246 = vmatprep.subr.mxu0 0.0
    %247 = vmatpush2.msra.mxu0 0.0
    %248 = vmatprep.subr.mxu0 0.0
    %249 = vmatpush2.msra.mxu0 0.0
    %250 = vmatprep.subr.mxu0 0.0
    %251 = vmatpush2.msra.mxu0 0.0
    %252 = vmatprep.subr.mxu0 0.0
    %253 = vmatpush2.msra.mxu0 0.0
    %254 = vmatprep.mubr.f32.mxu0 0.0
    %255 = vmatmul.mubr.f32.gmra.mxu0 %v166
    %v256 = vpop.f32.mrf.mxu0
    %v257 = vadd.f32 %v188, %v256
    %v258 = vpop.f32.mrf.mxu0
    %259 = vdwg.mxu0
    %v260 = vmax.f32 %v257, 0.0
    %v261 = vld [vmem:[#allocation8] sm:$0xff]
    %v262 = vld [vmem:[#allocation8 + $0x8] sm:$0xff]
    %v263 = vld [vmem:[#allocation8 + $0x10] sm:$0xff]
    %v264 = vld [vmem:[#allocation8 + $0x18] sm:$0xff]
    %v265 = vld [vmem:[#allocation8 + $0x20] sm:$0xff]
    %v266 = vld [vmem:[#allocation8 + $0x28] sm:$0xff]
    %v267 = vld [vmem:[#allocation8 + $0x30] sm:$0xff]
    %v268 = vld [vmem:[#allocation8 + $0x38] sm:$0xff]
    %v269 = vld [vmem:[#allocation8 + $0x40] sm:$0xff]
    %v270 = vld [vmem:[#allocation8 + $0x48] sm:$0xff]
    %v271 = vld [vmem:[#allocation8 + $0x50] sm:$0xff]
    %v272 = vld [vmem:[#allocation8 + $0x58] sm:$0xff]
    %v273 = vld [vmem:[#allocation8 + $0x60] sm:$0xff]
    %v274 = vld [vmem:[#allocation8 + $0x68] sm:$0xff]
    %v275 = vld [vmem:[#allocation8 + $0x70] sm:$0xff]
    %v276 = vld [vmem:[#allocation8 + $0x78] sm:$0xff]
    %v277 = vld [vmem:[%s6] sm:$0x1]
    %v279 = vlaneseq
    %v280 = vshrl.u32 %v279, 7
    %v281 = vsub.s32 0, %v280
    %v282 = vrot.slane %v277, %v281
    %284 = vmatprep.subr.mxu0 0.0
    %285 = vmatpush1.msra.mxu0 %v276
    %286 = vmatprep.subr.mxu0 0.0
    %287 = vmatpush1.msra.mxu0 %v275
    %288 = vmatprep.subr.mxu0 0.0
    %289 = vmatpush1.msra.mxu0 %v274
    %290 = vmatprep.subr.mxu0 0.0
    %291 = vmatpush1.msra.mxu0 %v273
    %292 = vmatprep.subr.mxu0 0.0
    %293 = vmatpush1.msra.mxu0 %v272
    %294 = vmatprep.subr.mxu0 0.0
    %295 = vmatpush1.msra.mxu0 %v271
    %296 = vmatprep.subr.mxu0 0.0
    %297 = vmatpush1.msra.mxu0 %v270
    %298 = vmatprep.subr.mxu0 0.0
    %299 = vmatpush1.msra.mxu0 %v269
    %300 = vmatprep.subr.mxu0 0.0
    %301 = vmatpush1.msra.mxu0 %v268
    %302 = vmatprep.subr.mxu0 0.0
    %303 = vmatpush1.msra.mxu0 %v267
    %304 = vmatprep.subr.mxu0 0.0
    %305 = vmatpush1.msra.mxu0 %v266
    %306 = vmatprep.subr.mxu0 0.0
    %307 = vmatpush1.msra.mxu0 %v265
    %308 = vmatprep.subr.mxu0 0.0
    %309 = vmatpush1.msra.mxu0 %v264
    %310 = vmatprep.subr.mxu0 0.0
    %311 = vmatpush1.msra.mxu0 %v263
    %312 = vmatprep.subr.mxu0 0.0
    %313 = vmatpush1.msra.mxu0 %v262
    %314 = vmatprep.subr.mxu0 0.0
    %315 = vmatpush1.msra.mxu0 %v261
    %316 = vmatprep.subr.mxu0 0.0
    %317 = vmatpush2.msra.mxu0 0.0
    %318 = vmatprep.subr.mxu0 0.0
    %319 = vmatpush2.msra.mxu0 0.0
    %320 = vmatprep.subr.mxu0 0.0
    %321 = vmatpush2.msra.mxu0 0.0
    %322 = vmatprep.subr.mxu0 0.0
    %323 = vmatpush2.msra.mxu0 0.0
    %324 = vmatprep.subr.mxu0 0.0
    %325 = vmatpush2.msra.mxu0 0.0
    %326 = vmatprep.subr.mxu0 0.0
    %327 = vmatpush2.msra.mxu0 0.0
    %328 = vmatprep.subr.mxu0 0.0
    %329 = vmatpush2.msra.mxu0 0.0
    %330 = vmatprep.subr.mxu0 0.0
    %331 = vmatpush2.msra.mxu0 0.0
    %332 = vmatprep.subr.mxu0 0.0
    %333 = vmatpush2.msra.mxu0 0.0
    %334 = vmatprep.subr.mxu0 0.0
    %335 = vmatpush2.msra.mxu0 0.0
    %336 = vmatprep.subr.mxu0 0.0
    %337 = vmatpush2.msra.mxu0 0.0
    %338 = vmatprep.subr.mxu0 0.0
    %339 = vmatpush2.msra.mxu0 0.0
    %340 = vmatprep.subr.mxu0 0.0
    %341 = vmatpush2.msra.mxu0 0.0
    %342 = vmatprep.subr.mxu0 0.0
    %343 = vmatpush2.msra.mxu0 0.0
    %344 = vmatprep.subr.mxu0 0.0
    %345 = vmatpush2.msra.mxu0 0.0
    %346 = vmatprep.subr.mxu0 0.0
    %347 = vmatpush2.msra.mxu0 0.0
    %348 = vmatprep.mubr.f32.mxu0 0.0
    %349 = vmatmul.mubr.f32.gmra.mxu0 %v260
    %v350 = vpop.f32.mrf.mxu0
    %v351 = vadd.f32 %v282, %v350
    %v352 = vpop.f32.mrf.mxu0
    %353 = vdwg.mxu0
    %354 = vst [vmem:[#allocation10] sm:$0xff] %v351
    // Predicated region
    $region46: #{tpu_custom_call.1} parent=1 // pred_check
      _
    $region47: #{tpu_custom_call.1} parent=1 // pred_check_branch
      %356 = sbr.rel (0) target = $region49
    $region48: #{tpu_custom_call.1} parent=1 // pred_region
      %s358 = ssub.s32 128, 32
      %359 = vsyncadd [#allocation4], %s358
      %s360 = sshll.u32 [#allocation10], 4
      %s361 = int_to_ptr.vmem [resolvable:$true] %s360
      %366 = dma.vmem_to_hbm [thread:$0]  %s361, 32, %s7, [#allocation4], 32, 32, 2
    $region49: #{tpu_custom_call.1} parent=1 // pred_fallthru
      _
    // Predicated region
    $region50: #{tpu_custom_call.1} parent=1 // pred_check
      _
    $region51: #{tpu_custom_call.1} parent=1 // pred_check_branch
      %368 = sbr.rel (0) target = $region53
    $region52: #{tpu_custom_call.1} parent=1 // pred_region
      %369 = dma.done [#allocation4], 128
    $region53: #{tpu_custom_call.1} parent=1 // pred_fallthru
      _
    %370 = vsyncpa [#allocation3], 1
    %371 = vsyncpa [#allocation6], 1
    %372 = vsyncpa [#allocation9], 1
    %373 = vsyncpa [#allocation4], 1

</llo_original>
